<compile_context>
chip_gen: v5e
topology: v5e:2x2
jax: 0.10.0
libtpu: 0.0.40
codegen_flags: <defaults>
</compile_context>

<pallas_src>
import jax
import jax.numpy as jnp
from jax.experimental import pallas as pl
from jax.experimental.pallas import tpu as pltpu

BN_EPS = 1e-5  # PyTorch BatchNorm1d default eps
LANE = 128     # TPU vreg lane width


def _round_up(n, m):
    return (n + m - 1) // m * m


def _pad_axis(a, axis, target):
    pad = target - a.shape[axis]
    if pad == 0:
        return a
    widths = [(0, 0)] * a.ndim
    widths[axis] = (0, pad)
    return jnp.pad(a, widths)


def _res_block_up_1d_kernel(
    x_ref,    # [B, C_in]      (or [B, C_pad] on the identity path)
    wf_ref,   # [C_in, 2*C_pad] = [W1 | Wid]  (or [C_pad, C_pad] when no projection)
    w2_ref,   # [C_pad, C_pad]
    bn_ref,   # [4, C_pad] rows = (gamma1, beta1, gamma2, beta2)
    o_ref,    # [B, C_pad]
):
    c_out = o_ref.shape[1]
    has_proj = wf_ref.shape[1] != c_out          # static python bool at trace time
    inv_b = 1.0 / x_ref.shape[0]

    x = x_ref[...].astype(jnp.float32)

    # One fused MXU matmul yields both the main branch and the identity
    # projection (when present).  c_out is lane-aligned, so the split below
    # is a vreg-aligned slice (no cross-lane shuffle).
    fused = jnp.dot(x, wf_ref[...], preferred_element_type=jnp.float32)
    if has_proj:
        h = fused[:, :c_out]
        identity = fused[:, c_out:]
    else:
        h = fused
        identity = x

    # ---- BatchNorm1d #1 (training mode, biased variance), folded affine ----
    mean = jnp.sum(h, axis=0, keepdims=True) * inv_b
    var = jnp.sum(h * h, axis=0, keepdims=True) * inv_b - mean * mean
    scale = bn_ref[0:1, :] * jax.lax.rsqrt(var + BN_EPS)
    shift = bn_ref[1:2, :] - mean * scale
    h = jnp.maximum(h * scale + shift, 0.0)      # BN + ReLU

    # ---- Linear #2 (bias dropped: cancelled by the following BN) ----
    h = jnp.dot(h, w2_ref[...], preferred_element_type=jnp.float32)

    # ---- BatchNorm1d #2, folded affine ----
    mean = jnp.sum(h, axis=0, keepdims=True) * inv_b
    var = jnp.sum(h * h, axis=0, keepdims=True) * inv_b - mean * mean
    scale = bn_ref[2:3, :] * jax.lax.rsqrt(var + BN_EPS)
    shift = bn_ref[3:4, :] - mean * scale
    h = h * scale + shift

    # residual add + final activation (lane-dense, unmasked store)
    o_ref[...] = jnp.maximum(h + identity, 0.0).astype(o_ref.dtype)


def res_block_up_1d(x, params):
    """params: dict with keys w1, b1, g1, be1, w2, b2, g2, be2 and (optionally) wid."""
    B, c_in = x.shape
    c_out = params["w1"].shape[1]
    has_proj = c_in != c_out

    # Lane-align the feature dimension (zero padding; padded columns stay
    # exactly zero through the whole block and are sliced off at the end).
    c_pad = max(_round_up(c_out, LANE), LANE)

    # Wrapper-side packing / padding (one-time, XLA-fused; not per-iteration work).
    w1 = _pad_axis(params["w1"], 1, c_pad)                         # [C_in, C_pad]
    w2 = _pad_axis(_pad_axis(params["w2"], 0, c_pad), 1, c_pad)    # [C_pad, C_pad]
    if has_proj:
        wid = _pad_axis(params["wid"], 1, c_pad)
        w_fused = jnp.concatenate([w1, wid], axis=1)               # [C_in, 2*C_pad]
        x_in = x
    else:
        # Identity path: x itself is the residual, so its feature dim must
        # match the padded output width (extra columns are zeros).
        w_fused = _pad_axis(w1, 0, c_pad)                          # [C_pad, C_pad]
        x_in = _pad_axis(x, 1, c_pad)

    bn = jnp.concatenate(
        [_pad_axis(params["g1"], 1, c_pad),
         _pad_axis(params["be1"], 1, c_pad),
         _pad_axis(params["g2"], 1, c_pad),
         _pad_axis(params["be2"], 1, c_pad)], axis=0)              # [4, C_pad]

    vmem_spec = pl.BlockSpec(memory_space=pltpu.MemorySpace.VMEM)
    args = (x_in, w_fused, w2, bn)
    out = pl.pallas_call(
        _res_block_up_1d_kernel,
        out_shape=jax.ShapeDtypeStruct((B, c_pad), jnp.float32),
        in_specs=[vmem_spec] * len(args),
        out_specs=vmem_spec,
    )(*args)
    return out[:, :c_out] if c_pad != c_out else out


def init_params(key, c_in, c_out):
    ks = jax.random.split(key, 5)
    scale1 = 1.0 / jnp.sqrt(c_in)
    scale2 = 1.0 / jnp.sqrt(c_out)
    p = {
        "w1": jax.random.uniform(ks[1], (c_in, c_out), jnp.float32, -scale1, scale1),
        "b1": jax.random.uniform(ks[2], (1, c_out), jnp.float32, -scale1, scale1),
        "g1": jnp.ones((1, c_out), jnp.float32),
        "be1": jnp.zeros((1, c_out), jnp.float32),
        "w2": jax.random.uniform(ks[3], (c_out, c_out), jnp.float32, -scale2, scale2),
        "b2": jax.random.uniform(ks[4], (1, c_out), jnp.float32, -scale2, scale2),
        "g2": jnp.ones((1, c_out), jnp.float32),
        "be2": jnp.zeros((1, c_out), jnp.float32),
    }
    if c_in != c_out:
        # identity projection (nn.Linear, bias=False)
        p["wid"] = jax.random.uniform(
            ks[0], (c_in, c_out), jnp.float32, -scale1, scale1
        )
    return p


def _reference(x, p):
    """Pure-JAX reference mirroring the PyTorch forward (training-mode BN),
    including the (BN-cancelled) linear biases."""
    identity = x @ p["wid"] if "wid" in p else x
    out = x @ p["w1"] + p["b1"]
    m = out.mean(0, keepdims=True)
    v = ((out - m) ** 2).mean(0, keepdims=True)
    out = (out - m) / jnp.sqrt(v + BN_EPS) * p["g1"] + p["be1"]
    out = jnp.maximum(out, 0.0)
    out = out @ p["w2"] + p["b2"]
    m = out.mean(0, keepdims=True)
    v = ((out - m) ** 2).mean(0, keepdims=True)
    out = (out - m) / jnp.sqrt(v + BN_EPS) * p["g2"] + p["be2"]
    out = out + identity
    return jnp.maximum(out, 0.0)


if __name__ == "__main__":
    key = jax.random.PRNGKey(0)
    k_x, k_p1, k_p2 = jax.random.split(key, 3)

    B = 8

    # Case 1: size_in_channels != size_out_channels (projection path)
    C_IN, C_OUT = 16, 32
    x = jax.random.normal(k_x, (B, C_IN), jnp.float32)
    params = init_params(k_p1, C_IN, C_OUT)
    out = jax.block_until_ready(res_block_up_1d(x, params))
    ref = _reference(x, params)
    assert out.shape == (B, C_OUT)
    assert jnp.allclose(out, ref, atol=1e-4, rtol=1e-4), (
        f"proj path: max abs err {jnp.max(jnp.abs(out - ref))}")

    # Case 2: size_in_channels == size_out_channels (nn.Identity path)
    C = 32
    x2 = jax.random.normal(k_x, (B, C), jnp.float32)
    params2 = init_params(k_p2, C, C)
    out2 = jax.block_until_ready(res_block_up_1d(x2, params2))
    ref2 = _reference(x2, params2)
    assert out2.shape == (B, C)
    assert jnp.allclose(out2, ref2, atol=1e-4, rtol=1e-4), (
        f"identity path: max abs err {jnp.max(jnp.abs(out2 - ref2))}")

    print("KERNEL_OK")
</pallas_src>

<mosaic_0001>
module attributes {stable_mosaic.version = 11 : i64} {
  func.func @_res_block_up_1d_kernel(%arg0: memref<8x16xf32, #tpu.memory_space<vmem>>, %arg1: memref<16x256xf32, #tpu.memory_space<vmem>>, %arg2: memref<128x128xf32, #tpu.memory_space<vmem>>, %arg3: memref<4x128xf32, #tpu.memory_space<vmem>>, %arg4: memref<8x128xf32, #tpu.memory_space<vmem>>) attributes {dimension_semantics = [], scalar_prefetch = 0 : i64, scratch_operands = 0 : i64, tpu.core_type = #tpu.core_type<tc>} {
    %c0 = arith.constant 0 : index
    %c0_0 = arith.constant 0 : index
    %0 = vector.load %arg0[%c0, %c0_0] : memref<8x16xf32, #tpu.memory_space<vmem>>, vector<8x16xf32>
    %c0_1 = arith.constant 0 : index
    %c0_2 = arith.constant 0 : index
    %1 = vector.load %arg1[%c0_1, %c0_2] : memref<16x256xf32, #tpu.memory_space<vmem>>, vector<16x256xf32>
    %cst = arith.constant dense<0.000000e+00> : vector<8x256xf32>
    %2 = tpu.matmul %0, %1, %cst {dimension_numbers = #tpu.dot_dimension_numbers<[1], [0], [0], [1], [0, 0, 1, 1], [], []>} : vector<8x16xf32>, vector<16x256xf32>, vector<8x256xf32> -> vector<8x256xf32>
    %3 = vector.extract_strided_slice %2 {offsets = [0, 0], sizes = [8, 128], strides = [1, 1]} : vector<8x256xf32> to vector<8x128xf32>
    %4 = vector.extract_strided_slice %2 {offsets = [0, 128], sizes = [8, 128], strides = [1, 1]} : vector<8x256xf32> to vector<8x128xf32>
    %cst_3 = arith.constant dense<0.000000e+00> : vector<128xf32>
    %5 = vector.multi_reduction <add>, %3, %cst_3 [0] : vector<8x128xf32> to vector<128xf32>
    %6 = vector.shape_cast %5 : vector<128xf32> to vector<1x128xf32>
    %cst_4 = arith.constant 1.250000e-01 : f32
    %7 = vector.broadcast %cst_4 : f32 to vector<1x128xf32>
    %8 = arith.mulf %6, %7 : vector<1x128xf32>
    %9 = arith.mulf %3, %3 : vector<8x128xf32>
    %cst_5 = arith.constant dense<0.000000e+00> : vector<128xf32>
    %10 = vector.multi_reduction <add>, %9, %cst_5 [0] : vector<8x128xf32> to vector<128xf32>
    %11 = vector.shape_cast %10 : vector<128xf32> to vector<1x128xf32>
    %cst_6 = arith.constant 1.250000e-01 : f32
    %12 = vector.broadcast %cst_6 : f32 to vector<1x128xf32>
    %13 = arith.mulf %11, %12 : vector<1x128xf32>
    %14 = arith.mulf %8, %8 : vector<1x128xf32>
    %15 = arith.subf %13, %14 : vector<1x128xf32>
    %c0_7 = arith.constant 0 : index
    %c0_8 = arith.constant 0 : index
    %16 = vector.load %arg3[%c0_7, %c0_8] : memref<4x128xf32, #tpu.memory_space<vmem>>, vector<1x128xf32>
    %cst_9 = arith.constant 9.99999974E-6 : f32
    %17 = vector.broadcast %cst_9 : f32 to vector<1x128xf32>
    %18 = arith.addf %15, %17 : vector<1x128xf32>
    %19 = math.rsqrt %18 : vector<1x128xf32>
    %20 = arith.mulf %16, %19 : vector<1x128xf32>
    %c1 = arith.constant 1 : index
    %c0_10 = arith.constant 0 : index
    %21 = vector.load %arg3[%c1, %c0_10] : memref<4x128xf32, #tpu.memory_space<vmem>>, vector<1x128xf32>
    %22 = arith.mulf %8, %20 : vector<1x128xf32>
    %23 = arith.subf %21, %22 : vector<1x128xf32>
    %24 = vector.broadcast %20 : vector<1x128xf32> to vector<8x128xf32>
    %25 = arith.mulf %3, %24 : vector<8x128xf32>
    %26 = vector.broadcast %23 : vector<1x128xf32> to vector<8x128xf32>
    %27 = arith.addf %25, %26 : vector<8x128xf32>
    %cst_11 = arith.constant 0.000000e+00 : f32
    %28 = vector.broadcast %cst_11 : f32 to vector<8x128xf32>
    %29 = arith.maximumf %27, %28 : vector<8x128xf32>
    %c0_12 = arith.constant 0 : index
    %c0_13 = arith.constant 0 : index
    %30 = vector.load %arg2[%c0_12, %c0_13] : memref<128x128xf32, #tpu.memory_space<vmem>>, vector<128x128xf32>
    %cst_14 = arith.constant dense<0.000000e+00> : vector<8x128xf32>
    %31 = tpu.matmul %29, %30, %cst_14 {dimension_numbers = #tpu.dot_dimension_numbers<[1], [0], [0], [1], [0, 0, 1, 1], [], []>} : vector<8x128xf32>, vector<128x128xf32>, vector<8x128xf32> -> vector<8x128xf32>
    %cst_15 = arith.constant dense<0.000000e+00> : vector<128xf32>
    %32 = vector.multi_reduction <add>, %31, %cst_15 [0] : vector<8x128xf32> to vector<128xf32>
    %33 = vector.shape_cast %32 : vector<128xf32> to vector<1x128xf32>
    %cst_16 = arith.constant 1.250000e-01 : f32
    %34 = vector.broadcast %cst_16 : f32 to vector<1x128xf32>
    %35 = arith.mulf %33, %34 : vector<1x128xf32>
    %36 = arith.mulf %31, %31 : vector<8x128xf32>
    %cst_17 = arith.constant dense<0.000000e+00> : vector<128xf32>
    %37 = vector.multi_reduction <add>, %36, %cst_17 [0] : vector<8x128xf32> to vector<128xf32>
    %38 = vector.shape_cast %37 : vector<128xf32> to vector<1x128xf32>
    %cst_18 = arith.constant 1.250000e-01 : f32
    %39 = vector.broadcast %cst_18 : f32 to vector<1x128xf32>
    %40 = arith.mulf %38, %39 : vector<1x128xf32>
    %41 = arith.mulf %35, %35 : vector<1x128xf32>
    %42 = arith.subf %40, %41 : vector<1x128xf32>
    %c2 = arith.constant 2 : index
    %c0_19 = arith.constant 0 : index
    %43 = vector.load %arg3[%c2, %c0_19] : memref<4x128xf32, #tpu.memory_space<vmem>>, vector<1x128xf32>
    %cst_20 = arith.constant 9.99999974E-6 : f32
    %44 = vector.broadcast %cst_20 : f32 to vector<1x128xf32>
    %45 = arith.addf %42, %44 : vector<1x128xf32>
    %46 = math.rsqrt %45 : vector<1x128xf32>
    %47 = arith.mulf %43, %46 : vector<1x128xf32>
    %c3 = arith.constant 3 : index
    %c0_21 = arith.constant 0 : index
    %48 = vector.load %arg3[%c3, %c0_21] : memref<4x128xf32, #tpu.memory_space<vmem>>, vector<1x128xf32>
    %49 = arith.mulf %35, %47 : vector<1x128xf32>
    %50 = arith.subf %48, %49 : vector<1x128xf32>
    %51 = vector.broadcast %47 : vector<1x128xf32> to vector<8x128xf32>
    %52 = arith.mulf %31, %51 : vector<8x128xf32>
    %53 = vector.broadcast %50 : vector<1x128xf32> to vector<8x128xf32>
    %54 = arith.addf %52, %53 : vector<8x128xf32>
    %55 = arith.addf %54, %4 : vector<8x128xf32>
    %cst_22 = arith.constant 0.000000e+00 : f32
    %56 = vector.broadcast %cst_22 : f32 to vector<8x128xf32>
    %57 = arith.maximumf %55, %56 : vector<8x128xf32>
    %c0_23 = arith.constant 0 : index
    %c0_24 = arith.constant 0 : index
    %58 = vector.load %arg4[%c0_23, %c0_24] : memref<8x128xf32, #tpu.memory_space<vmem>>, vector<8x128xf32>
    tpu.vector_store %arg4[%c0_23, %c0_24], %57 {strides = array<i32>} : memref<8x128xf32, #tpu.memory_space<vmem>>, vector<8x128xf32>,
    return
  }
}

</mosaic_0001>

<llo_original>
// kernel: tpu_custom_call.1
$region0: #{tpu_custom_call.1}
  #allocation0 [shape = 'u32[]', space=smem, size = 0x4, offset = 0x4, fixed_abs, tag = 'smem constant byte address 0x4 - core index']
  #allocation1 [shape = 'u32[72,128]{1,0:T(1,128)}', space=vmem, size = 0x9000, scoped, tag = 'internal scratch']
  %s0 = inlined_call_operand.hbm [shape: f32[8,16], index: 0, kind: input, shape index: {}]
  %s1 = inlined_call_operand.hbm [shape: f32[16,256], index: 1, kind: input, shape index: {}]
  %s2 = inlined_call_operand.hbm [shape: f32[128,128], index: 2, kind: input, shape index: {}]
  %s3 = inlined_call_operand.hbm [shape: f32[4,128], index: 3, kind: input, shape index: {}]
  %s4 = inlined_call_operand.hbm [shape: f32[8,128], index: 4, kind: output, shape index: {}]
  %s5 = sld [smem:[#allocation0]]
  $region42: #{tpu_custom_call.1} parent=0
    _
  %s7 = ssub.s32 1, %s5
  %s8 = scalar_select 0, %s7, %s5
  $region1: #{tpu_custom_call.1} parent=0
    #allocation2 [shape = 'u8[4096]{0}', space=vmem, size = 0x1000, scoped, tag = 'input window, operand 0, single buffered']
    #allocation3 [shape = 's32[1]{0}', space=sflag, size = 0x4, scoped, tag = 'scoped memory for tpu_custom_call.1']
    #allocation4 [shape = 's32[1]{0}', space=sflag, size = 0x4, scoped, tag = 'scoped memory for tpu_custom_call.1']
    #allocation5 [shape = 'u8[16384]{0}', space=vmem, size = 0x4000, scoped, tag = 'input window, operand 1, single buffered']
    #allocation6 [shape = 's32[1]{0}', space=sflag, size = 0x4, scoped, tag = 'scoped memory for tpu_custom_call.1']
    #allocation7 [shape = 'u8[65536]{0}', space=vmem, size = 0x10000, scoped, tag = 'input window, operand 2, single buffered']
    #allocation8 [shape = 'u8[2048]{0}', space=vmem, size = 0x800, scoped, tag = 'input window, operand 3, single buffered']
    #allocation9 [shape = 's32[1]{0}', space=sflag, size = 0x4, scoped, tag = 'scoped memory for tpu_custom_call.1']
    #allocation10 [shape = 'u8[4096]{0}', space=vmem, size = 0x1000, scoped, tag = 'output window, operand 0, single buffered']
    %9 = vsyncpa [#allocation3], 0
    %10 = vsyncpa [#allocation6], 0
    %11 = vsyncpa [#allocation9], 0
    %12 = vsyncpa [#allocation4], 0
    // Predicated region
    $region2: #{tpu_custom_call.1} parent=1 // pred_check
      _
    $region3: #{tpu_custom_call.1} parent=1 // pred_check_branch
      %14 = sbr.rel (0) target = $region5
    $region4: #{tpu_custom_call.1} parent=1 // pred_region
      %16 = vsyncadd [#allocation3], 0
      %s18 = sshll.u32 %s0, 4
      %s19 = int_to_ptr.hbm [resolvable:$true] %s18
      %s20 = sshll.u32 [#allocation2], 4
      %s21 = int_to_ptr.vmem [resolvable:$true] %s20
      %23 = dma.hbm_to_vmem [thread:$0]  %s19, 128, %s21, [#allocation3]
    $region5: #{tpu_custom_call.1} parent=1 // pred_fallthru
      _
    // Predicated region
    $region6: #{tpu_custom_call.1} parent=1 // pred_check
      _
    $region7: #{tpu_custom_call.1} parent=1 // pred_check_branch
      %25 = sbr.rel (0) target = $region9
    $region8: #{tpu_custom_call.1} parent=1 // pred_region
      %27 = vsyncadd [#allocation6], 0
      %s28 = sshll.u32 %s1, 4
      %s29 = int_to_ptr.hbm [resolvable:$true] %s28
      %s30 = sshll.u32 [#allocation5], 4
      %s31 = int_to_ptr.vmem [resolvable:$true] %s30
      %36 = dma.hbm_to_vmem [thread:$0]  %s29, 512, %s31, [#allocation6], 256, 256, 16
    $region9: #{tpu_custom_call.1} parent=1 // pred_fallthru
      _
    // Predicated region
    $region10: #{tpu_custom_call.1} parent=1 // pred_check
      _
    $region11: #{tpu_custom_call.1} parent=1 // pred_check_branch
      %38 = sbr.rel (0) target = $region13
    $region12: #{tpu_custom_call.1} parent=1 // pred_region
      %40 = vsyncadd [#allocation6], 0
      %s41 = sshll.u32 %s2, 4
      %s42 = int_to_ptr.hbm [resolvable:$true] %s41
      %s43 = sshll.u32 [#allocation7], 4
      %s44 = int_to_ptr.vmem [resolvable:$true] %s43
      %49 = dma.hbm_to_vmem [thread:$0]  %s42, 2048, %s44, [#allocation6], 128, 128, 8
    $region13: #{tpu_custom_call.1} parent=1 // pred_fallthru
      _
    // Predicated region
    $region14: #{tpu_custom_call.1} parent=1 // pred_check
      _
    $region15: #{tpu_custom_call.1} parent=1 // pred_check_branch
      %51 = sbr.rel (0) target = $region17
    $region16: #{tpu_custom_call.1} parent=1 // pred_region
      %53 = vsyncadd [#allocation9], 0
      %s55 = sshll.u32 %s3, 4
      %s56 = int_to_ptr.hbm [resolvable:$true] %s55
      %s57 = sshll.u32 [#allocation8], 4
      %s58 = int_to_ptr.vmem [resolvable:$true] %s57
      %60 = dma.hbm_to_vmem [thread:$0]  %s56, 64, %s58, [#allocation9]
    $region17: #{tpu_custom_call.1} parent=1 // pred_fallthru
      _
    // Predicated region
    $region18: #{tpu_custom_call.1} parent=1 // pred_check
      _
    $region19: #{tpu_custom_call.1} parent=1 // pred_check_branch
      %62 = sbr.rel (0) target = $region21
    $region20: #{tpu_custom_call.1} parent=1 // pred_region
      %64 = dma.done [#allocation3], 128
    $region21: #{tpu_custom_call.1} parent=1 // pred_fallthru
      _
    // Predicated region
    $region22: #{tpu_custom_call.1} parent=1 // pred_check
      _
    $region23: #{tpu_custom_call.1} parent=1 // pred_check_branch
      %66 = sbr.rel (0) target = $region25
    $region24: #{tpu_custom_call.1} parent=1 // pred_region
      %68 = dma.done [#allocation6], 512
    $region25: #{tpu_custom_call.1} parent=1 // pred_fallthru
      _
    // Predicated region
    $region26: #{tpu_custom_call.1} parent=1 // pred_check
      _
    $region27: #{tpu_custom_call.1} parent=1 // pred_check_branch
      %70 = sbr.rel (0) target = $region29
    $region28: #{tpu_custom_call.1} parent=1 // pred_region
      %72 = dma.done [#allocation6], 2048
    $region29: #{tpu_custom_call.1} parent=1 // pred_fallthru
      _
    // Predicated region
    $region30: #{tpu_custom_call.1} parent=1 // pred_check
      _
    $region31: #{tpu_custom_call.1} parent=1 // pred_check_branch
      %74 = sbr.rel (0) target = $region33
    $region32: #{tpu_custom_call.1} parent=1 // pred_region
      %76 = dma.done [#allocation9], 64
    $region33: #{tpu_custom_call.1} parent=1 // pred_fallthru
      _
    %v77 = vld [vmem:[#allocation2] sm:$0xff]
    %v78 = vld [vmem:[#allocation5] sm:$0xff]
    %v79 = vld [vmem:[#allocation5 + $0x8] sm:$0xff]
    %v80 = vld [vmem:[#allocation5 + $0x10] sm:$0xff]
    %v81 = vld [vmem:[#allocation5 + $0x18] sm:$0xff]
    %vm82 = vcmask 130048
    %v84 = vsel %vm82, %v77, 0
    %86 = vmatpush.msra.mxu0 0.0
    %87 = vmatpush.msra.mxu0 0.0
    %88 = vmatpush.msra.mxu0 0.0
    %89 = vmatpush.msra.mxu0 0.0
    %90 = vmatpush.msra.mxu0 0.0
    %91 = vmatpush.msra.mxu0 0.0
    %92 = vmatpush.msra.mxu0 0.0
    %93 = vmatpush.msra.mxu0 0.0
    %94 = vmatpush.msra.mxu0 0.0
    %95 = vmatpush.msra.mxu0 0.0
    %96 = vmatpush.msra.mxu0 0.0
    %97 = vmatpush.msra.mxu0 0.0
    %98 = vmatpush.msra.mxu0 0.0
    %99 = vmatpush.msra.mxu0 0.0
    %100 = vmatpush.msra.mxu0 %v80
    %101 = vmatpush.msra.mxu0 %v78
    %102 = vmatmul.f32.gmra.mxu0 %v84
    %v103 = vpop.f32.mrf.mxu0
    %v104 = vadd.f32 0.0, %v103
    %105 = vdwg.mxu0
    %106 = vmatpush.msra.mxu0 0.0
    %107 = vmatpush.msra.mxu0 0.0
    %108 = vmatpush.msra.mxu0 0.0
    %109 = vmatpush.msra.mxu0 0.0
    %110 = vmatpush.msra.mxu0 0.0
    %111 = vmatpush.msra.mxu0 0.0
    %112 = vmatpush.msra.mxu0 0.0
    %113 = vmatpush.msra.mxu0 0.0
    %114 = vmatpush.msra.mxu0 0.0
    %115 = vmatpush.msra.mxu0 0.0
    %116 = vmatpush.msra.mxu0 0.0
    %117 = vmatpush.msra.mxu0 0.0
    %118 = vmatpush.msra.mxu0 0.0
    %119 = vmatpush.msra.mxu0 0.0
    %120 = vmatpush.msra.mxu0 %v81
    %121 = vmatpush.msra.mxu0 %v79
    %122 = vmatmul.f32.gmra.mxu0 %v84
    %v123 = vpop.f32.mrf.mxu0
    %v124 = vadd.f32 0.0, %v123
    %125 = vdwg.mxu0
    %v126 = vrot.slane %v104, 4
    %v127 = vadd.f32 %v104, %v126
    %v128 = vrot.slane %v127, 2
    %v129 = vadd.f32 %v127, %v128
    %v130 = vrot.slane %v129, 1
    %v131 = vadd.f32 %v129, %v130
    %v132 = vmul.f32 %v131, 0.125
    %v133 = vmul.f32 %v104, %v104
    %v134 = vrot.slane %v133, 4
    %v135 = vadd.f32 %v133, %v134
    %v136 = vrot.slane %v135, 2
    %v137 = vadd.f32 %v135, %v136
    %v138 = vrot.slane %v137, 1
    %v139 = vadd.f32 %v137, %v138
    %v140 = vmul.f32 %v139, 0.125
    %v141 = vmul.f32 %v132, %v132
    %v142 = vsub.f32 %v140, %v141
    %v143 = vld [vmem:[#allocation8] sm:$0x1]
    %v144 = vadd.f32 %v142, 1e-05
    %v145 = vrsqrt.pop %v144
    %v146 = vmul.f32 %v145, %v144
    %v147 = vmul.f32 %v146, %v145
    %v148 = vmul.f32 0.5, %v147
    %v149 = vsub.f32 1.5, %v148
    %v150 = vmul.f32 %v145, %v149
    %vm151 = vweird.f32 %v144
    %vm152 = vweird.f32 %v145
    %vm153 = vmor %vm151, %vm152
    %v154 = vsel %vm153, %v145, %v150
    %v155 = vmul.f32 %v143, %v154
    %v156 = vld [vmem:[#allocation8 + $0x1] sm:$0x1]
    %v157 = vmul.f32 %v132, %v155
    %v158 = vsub.f32 %v156, %v157
    %v159 = vperm.slane %v155, 0
    %v160 = vmul.f32 %v104, %v159
    %v161 = vperm.slane %v158, 0
    %v162 = vadd.f32 %v160, %v161
    %v163 = vmax.f32 %v162, 0.0
    %v164 = vld [vmem:[#allocation7] sm:$0xff]
    %v165 = vld [vmem:[#allocation7 + $0x8] sm:$0xff]
    %v166 = vld [vmem:[#allocation7 + $0x10] sm:$0xff]
    %v167 = vld [vmem:[#allocation7 + $0x18] sm:$0xff]
    %v168 = vld [vmem:[#allocation7 + $0x20] sm:$0xff]
    %v169 = vld [vmem:[#allocation7 + $0x28] sm:$0xff]
    %v170 = vld [vmem:[#allocation7 + $0x30] sm:$0xff]
    %v171 = vld [vmem:[#allocation7 + $0x38] sm:$0xff]
    %v172 = vld [vmem:[#allocation7 + $0x40] sm:$0xff]
    %v173 = vld [vmem:[#allocation7 + $0x48] sm:$0xff]
    %v174 = vld [vmem:[#allocation7 + $0x50] sm:$0xff]
    %v175 = vld [vmem:[#allocation7 + $0x58] sm:$0xff]
    %v176 = vld [vmem:[#allocation7 + $0x60] sm:$0xff]
    %v177 = vld [vmem:[#allocation7 + $0x68] sm:$0xff]
    %v178 = vld [vmem:[#allocation7 + $0x70] sm:$0xff]
    %v179 = vld [vmem:[#allocation7 + $0x78] sm:$0xff]
    %180 = vmatpush.msra.mxu0 %v179
    %181 = vmatpush.msra.mxu0 %v178
    %182 = vmatpush.msra.mxu0 %v177
    %183 = vmatpush.msra.mxu0 %v176
    %184 = vmatpush.msra.mxu0 %v175
    %185 = vmatpush.msra.mxu0 %v174
    %186 = vmatpush.msra.mxu0 %v173
    %187 = vmatpush.msra.mxu0 %v172
    %188 = vmatpush.msra.mxu0 %v171
    %189 = vmatpush.msra.mxu0 %v170
    %190 = vmatpush.msra.mxu0 %v169
    %191 = vmatpush.msra.mxu0 %v168
    %192 = vmatpush.msra.mxu0 %v167
    %193 = vmatpush.msra.mxu0 %v166
    %194 = vmatpush.msra.mxu0 %v165
    %195 = vmatpush.msra.mxu0 %v164
    %196 = vmatmul.f32.gmra.mxu0 %v163
    %v197 = vpop.f32.mrf.mxu0
    %v198 = vadd.f32 0.0, %v197
    %199 = vdwg.mxu0
    %v200 = vrot.slane %v198, 4
    %v201 = vadd.f32 %v198, %v200
    %v202 = vrot.slane %v201, 2
    %v203 = vadd.f32 %v201, %v202
    %v204 = vrot.slane %v203, 1
    %v205 = vadd.f32 %v203, %v204
    %v206 = vmul.f32 %v205, 0.125
    %v207 = vmul.f32 %v198, %v198
    %v208 = vrot.slane %v207, 4
    %v209 = vadd.f32 %v207, %v208
    %v210 = vrot.slane %v209, 2
    %v211 = vadd.f32 %v209, %v210
    %v212 = vrot.slane %v211, 1
    %v213 = vadd.f32 %v211, %v212
    %v214 = vmul.f32 %v213, 0.125
    %v215 = vmul.f32 %v206, %v206
    %v216 = vsub.f32 %v214, %v215
    %v217 = vld [vmem:[#allocation8 + $0x2] sm:$0x1]
    %v218 = vadd.f32 %v216, 1e-05
    %v219 = vrsqrt.pop %v218
    %v220 = vmul.f32 %v219, %v218
    %v221 = vmul.f32 %v220, %v219
    %v222 = vmul.f32 0.5, %v221
    %v223 = vsub.f32 1.5, %v222
    %v224 = vmul.f32 %v219, %v223
    %vm225 = vweird.f32 %v218
    %vm226 = vweird.f32 %v219
    %vm227 = vmor %vm225, %vm226
    %v228 = vsel %vm227, %v219, %v224
    %v229 = vmul.f32 %v217, %v228
    %v230 = vld [vmem:[#allocation8 + $0x3] sm:$0x1]
    %v231 = vmul.f32 %v206, %v229
    %v232 = vsub.f32 %v230, %v231
    %v233 = vperm.slane %v229, 0
    %v234 = vmul.f32 %v198, %v233
    %v235 = vperm.slane %v232, 0
    %v236 = vadd.f32 %v234, %v235
    %v237 = vadd.f32 %v236, %v124
    %v238 = vmax.f32 %v237, 0.0
    %239 = vst [vmem:[#allocation10] sm:$0xff] %v238
    // Predicated region
    $region34: #{tpu_custom_call.1} parent=1 // pred_check
      _
    $region35: #{tpu_custom_call.1} parent=1 // pred_check_branch
      %241 = sbr.rel (0) target = $region37
    $region36: #{tpu_custom_call.1} parent=1 // pred_region
      %243 = vsyncadd [#allocation4], 0
      %s245 = sshll.u32 [#allocation10], 4
      %s246 = int_to_ptr.vmem [resolvable:$true] %s245
      %s247 = sshll.u32 %s4, 4
      %s248 = int_to_ptr.hbm [resolvable:$true] %s247
      %250 = dma.vmem_to_hbm [thread:$0]  %s246, 128, %s248, [#allocation4]
    $region37: #{tpu_custom_call.1} parent=1 // pred_fallthru
      _
    // Predicated region
    $region38: #{tpu_custom_call.1} parent=1 // pred_check
      _
    $region39: #{tpu_custom_call.1} parent=1 // pred_check_branch
      %252 = sbr.rel (0) target = $region41
    $region40: #{tpu_custom_call.1} parent=1 // pred_region
      %254 = dma.done [#allocation4], 128
    $region41: #{tpu_custom_call.1} parent=1 // pred_fallthru
      _
    %255 = vsyncpa [#allocation3], 1
    %256 = vsyncpa [#allocation6], 1
    %257 = vsyncpa [#allocation9], 1
    %258 = vsyncpa [#allocation4], 1

</llo_original>
